<compile_context>
chip_gen: v5e
topology: v5e:2x2
jax: 0.10.0
libtpu: 0.0.40
codegen_flags: <defaults>
</compile_context>

<pallas_src>
import math
import functools

import jax
import jax.numpy as jnp
from jax.experimental import pallas as pl
from jax.experimental.pallas import tpu as pltpu


# ----------------------------------------------------------------------------
# Fused kernel: projection (MXU, bf16 in / f32 acc) + in-kernel one-hot gathers
# + max-margin ranking loss reduced to a scalar.
# ----------------------------------------------------------------------------
def _hetegraphrec_fused_kernel(xa_ref, xb_ref, wa_ref, wb_ref, b_ref,
                               n1_ref, n2_ref, neg_ref,
                               emb_ref, loss_ref, *, margin, n_neg):
    # --- (1) linear projection: emb = xa @ Wa + xb @ Wb + bias --------------
    emb = (jnp.dot(xa_ref[...], wa_ref[...], preferred_element_type=jnp.float32)
           + jnp.dot(xb_ref[...], wb_ref[...], preferred_element_type=jnp.float32)
           + b_ref[...])                                   # (B, Dout) f32
    emb_ref[...] = emb
    emb_bf16 = emb.astype(jnp.bfloat16)

    B = emb.shape[0]
    E = n1_ref.shape[0]
    N = neg_ref.shape[1]

    # --- (2) in-kernel gathers via one-hot selection on the MXU -------------
    iota_eb = jax.lax.broadcasted_iota(jnp.int32, (E, B), 1)          # (E, B)
    oh_n1 = jnp.where(iota_eb == n1_ref[...], 1.0, 0.0).astype(jnp.bfloat16)
    oh_n2 = jnp.where(iota_eb == n2_ref[...], 1.0, 0.0)               # f32, exact

    # n1 = emb[n1_idx]  (exact row selection)
    n1 = jnp.dot(oh_n1, emb_bf16, preferred_element_type=jnp.float32)  # (E, Dout)
    n1_bf16 = n1.astype(jnp.bfloat16)

    # scores of every edge source against every unique node: (E, B)
    scores = jax.lax.dot_general(
        n1_bf16, emb_bf16, (((1,), (1,)), ((), ())),
        preferred_element_type=jnp.float32)

    # positive score  s_pos[e] = n1[e] . emb[n2_idx[e]]   (exact select, f32)
    s_pos = jnp.sum(scores * oh_n2, axis=-1, keepdims=True)           # (E, 1)

    # negative scores s_neg[e, j] = n1[e] . emb[neg_idx[j]] (exact column select)
    iota_bn = jax.lax.broadcasted_iota(jnp.int32, (B, N), 0)          # (B, N)
    oh_neg_t = jnp.where(iota_bn == neg_ref[...], 1.0, 0.0)           # (B, N) f32
    s_neg = jnp.dot(scores, oh_neg_t, preferred_element_type=jnp.float32)  # (E, N)

    # --- (3) hinge loss, reduced to a single scalar in-kernel (all f32 VPU) -
    hinge = jnp.maximum(s_neg - s_pos + margin, 0.0)                  # (E, N)
    per_edge = jnp.sum(hinge, axis=-1, keepdims=True) * (1.0 / n_neg) # (E, 1)
    loss_ref[...] = jnp.sum(per_edge, axis=0, keepdims=True)          # (1, 1)


# ----------------------------------------------------------------------------
# Jitted wrapper: combine-type handling, bf16 casts, single pallas_call.
# ----------------------------------------------------------------------------
@functools.partial(jax.jit, static_argnames=("margin",))
def hetegraphrec_forward(self_feats, neigh_feats, weight, bias,
                         n1_idx, n2_idx, neg_idx, *, margin=0.1):
    """Returns (unique_nodes_embedding [B, Dout] f32, scalar loss f32)."""
    B, Din = self_feats.shape
    Dout = weight.shape[1]
    E = n1_idx.shape[0]
    N = neg_idx.shape[0]

    # combine_type without materializing a concat in HBM.
    if weight.shape[0] == 2 * Din:          # 'concat'
        w_a, w_b = weight[:Din], weight[Din:]
    elif weight.shape[0] == Din:            # 'sum': (a + b) @ W == a@W + b@W
        w_a, w_b = weight, weight
    else:
        raise ValueError("weight first dim must be Din or 2*Din")

    # bf16 MXU operands (f32 accumulation inside the kernel); bias stays f32.
    xa = self_feats.astype(jnp.bfloat16)
    xb = neigh_feats.astype(jnp.bfloat16)
    wa = w_a.astype(jnp.bfloat16)
    wb = w_b.astype(jnp.bfloat16)
    bias2d = bias.reshape(1, Dout).astype(jnp.float32)
    n1c = n1_idx.reshape(E, 1).astype(jnp.int32)
    n2c = n2_idx.reshape(E, 1).astype(jnp.int32)
    negr = neg_idx.reshape(1, N).astype(jnp.int32)

    kernel = functools.partial(_hetegraphrec_fused_kernel,
                               margin=float(margin), n_neg=N)

    emb, loss = pl.pallas_call(
        kernel,
        out_shape=(jax.ShapeDtypeStruct((B, Dout), jnp.float32),
                   jax.ShapeDtypeStruct((1, 1), jnp.float32)),
        grid=(1,),                           # whole problem in one grid step
        in_specs=[
            pl.BlockSpec((B, Din), lambda i: (0, 0)),     # self feats (bf16)
            pl.BlockSpec((B, Din), lambda i: (0, 0)),     # neigh feats (bf16)
            pl.BlockSpec((Din, Dout), lambda i: (0, 0)),  # W[:Din]  (bf16)
            pl.BlockSpec((Din, Dout), lambda i: (0, 0)),  # W[Din:]  (bf16)
            pl.BlockSpec((1, Dout), lambda i: (0, 0)),    # bias (f32)
            pl.BlockSpec((E, 1), lambda i: (0, 0)),       # edge source ids
            pl.BlockSpec((E, 1), lambda i: (0, 0)),       # edge target ids
            pl.BlockSpec((1, N), lambda i: (0, 0)),       # negative ids
        ],
        out_specs=(
            pl.BlockSpec((B, Dout), lambda i: (0, 0)),    # embeddings (f32)
            pl.BlockSpec((1, 1), lambda i: (0, 0)),       # scalar loss
        ),
        compiler_params=pltpu.CompilerParams(
            dimension_semantics=("arbitrary",)),
    )(xa, xb, wa, wb, bias2d, n1c, n2c, negr)

    return emb, loss[0, 0]


# ----------------------------------------------------------------------------
# Plain-JAX f32 reference (for a sanity check in the driver).
# ----------------------------------------------------------------------------
def _reference_forward(self_feats, neigh_feats, weight, bias,
                       n1_idx, n2_idx, neg_idx, margin=0.1):
    hi = jax.lax.Precision.HIGHEST
    combined = jnp.concatenate([self_feats, neigh_feats], axis=-1)
    emb = jnp.dot(combined, weight, precision=hi) + bias
    n1, n2, neg = emb[n1_idx], emb[n2_idx], emb[neg_idx]
    s_neg = jnp.dot(n1, neg.T, precision=hi)
    s_pos = jnp.sum(n1 * n2, axis=-1, keepdims=True)
    hinge = jnp.maximum(s_neg - s_pos + margin, 0.0)
    return emb, jnp.sum(jnp.mean(hinge, axis=-1))


# ----------------------------------------------------------------------------
# Driver
# ----------------------------------------------------------------------------
if __name__ == "__main__":
    key = jax.random.PRNGKey(0)
    input_dim, output_dim = 64, 128
    combine_type = "concat"        # exercises the [2*input_dim, output_dim] weight
    B = 256                        # unique nodes
    E = 8                          # edges in the loss
    N_NEG = 128                    # shared negative samples
    margin = 0.1

    k_self, k_neigh, k_edge, k_neg, kw, kb = jax.random.split(key, 6)

    # TODO(synk): sampler.sample_negative_nodes / networkx label lookups /
    # unique_nodes.index are Python-side data-dependent glue with no Pallas
    # equivalent; here they are replaced by precomputed integer index arrays.
    self_feats = jax.random.normal(k_self, (B, input_dim), jnp.float32)
    neigh_feats = jax.random.normal(k_neigh, (B, input_dim), jnp.float32)

    # Parameter init mirroring _init_weights_bias(): uniform(-stdv, stdv).
    din_eff = input_dim * 2 if combine_type == "concat" else input_dim
    stdv = 1.0 / math.sqrt(output_dim)
    weight = jax.random.uniform(kw, (din_eff, output_dim), jnp.float32, -stdv, stdv)
    bias = jax.random.uniform(kb, (output_dim,), jnp.float32, -stdv, stdv)

    edge_idx = jax.random.randint(k_edge, (E, 2), 0, B, dtype=jnp.int32)
    neg_idx = jax.random.randint(k_neg, (N_NEG,), 0, B, dtype=jnp.int32)

    emb, loss = hetegraphrec_forward(self_feats, neigh_feats, weight, bias,
                                     edge_idx[:, 0], edge_idx[:, 1], neg_idx,
                                     margin=margin)
    jax.block_until_ready((emb, loss))

    # Sanity check against the f32 reference (bf16 MXU inputs => loose tols).
    emb_ref, loss_ref = _reference_forward(self_feats, neigh_feats, weight, bias,
                                           edge_idx[:, 0], edge_idx[:, 1],
                                           neg_idx, margin)
    emb_ok = bool(jnp.allclose(emb, emb_ref, rtol=3e-2, atol=3e-2))
    loss_ok = bool(jnp.allclose(loss, loss_ref, rtol=1e-1, atol=1e-1))
    if not (emb_ok and loss_ok):
        raise SystemExit(
            f"MISMATCH emb_ok={emb_ok} loss_ok={loss_ok} "
            f"loss={float(loss):.4f} loss_ref={float(loss_ref):.4f}")

    print("KERNEL_OK")
</pallas_src>

<mosaic_0001>
module attributes {stable_mosaic.version = 11 : i64} {
  func.func @_hetegraphrec_fused_kernel(%arg0: i32, %arg1: memref<256x64xbf16, #tpu.memory_space<vmem>>, %arg2: memref<256x64xbf16, #tpu.memory_space<vmem>>, %arg3: memref<64x128xbf16, #tpu.memory_space<vmem>>, %arg4: memref<64x128xbf16, #tpu.memory_space<vmem>>, %arg5: memref<1x128xf32, #tpu.memory_space<vmem>>, %arg6: memref<8x1xi32, #tpu.memory_space<vmem>>, %arg7: memref<8x1xi32, #tpu.memory_space<vmem>>, %arg8: memref<1x128xi32, #tpu.memory_space<vmem>>, %arg9: memref<256x128xf32, #tpu.memory_space<vmem>>, %arg10: memref<1x1xf32, #tpu.memory_space<vmem>>) attributes {dimension_semantics = [#tpu.dimension_semantics<arbitrary>], iteration_bounds = array<i64: 1>, scalar_prefetch = 0 : i64, scratch_operands = 0 : i64, tpu.core_type = #tpu.core_type<tc>, window_params = [{pipeline_mode = #tpu.pipeline_mode<synchronous>, transform_indices = @transform_0, window_bounds = array<i64: 256, 64>}, {pipeline_mode = #tpu.pipeline_mode<synchronous>, transform_indices = @transform_1, window_bounds = array<i64: 256, 64>}, {pipeline_mode = #tpu.pipeline_mode<synchronous>, transform_indices = @transform_2, window_bounds = array<i64: 64, 128>}, {pipeline_mode = #tpu.pipeline_mode<synchronous>, transform_indices = @transform_3, window_bounds = array<i64: 64, 128>}, {pipeline_mode = #tpu.pipeline_mode<synchronous>, transform_indices = @transform_4, window_bounds = array<i64: 1, 128>}, {pipeline_mode = #tpu.pipeline_mode<synchronous>, transform_indices = @transform_5, window_bounds = array<i64: 8, 1>}, {pipeline_mode = #tpu.pipeline_mode<synchronous>, transform_indices = @transform_6, window_bounds = array<i64: 8, 1>}, {pipeline_mode = #tpu.pipeline_mode<synchronous>, transform_indices = @transform_7, window_bounds = array<i64: 1, 128>}, {pipeline_mode = #tpu.pipeline_mode<synchronous>, transform_indices = @transform_8, window_bounds = array<i64: 256, 128>}, {pipeline_mode = #tpu.pipeline_mode<synchronous>, transform_indices = @transform_9, window_bounds = array<i64: 1, 1>}]} {
    %c0 = arith.constant 0 : index
    %c0_0 = arith.constant 0 : index
    %0 = vector.load %arg1[%c0, %c0_0] : memref<256x64xbf16, #tpu.memory_space<vmem>>, vector<256x64xbf16>
    %c0_1 = arith.constant 0 : index
    %c0_2 = arith.constant 0 : index
    %1 = vector.load %arg3[%c0_1, %c0_2] : memref<64x128xbf16, #tpu.memory_space<vmem>>, vector<64x128xbf16>
    %cst = arith.constant dense<0.000000e+00> : vector<256x128xf32>
    %2 = tpu.matmul %0, %1, %cst {dimension_numbers = #tpu.dot_dimension_numbers<[1], [0], [0], [1], [0, 0, 1, 1], [], []>} : vector<256x64xbf16>, vector<64x128xbf16>, vector<256x128xf32> -> vector<256x128xf32>
    %c0_3 = arith.constant 0 : index
    %c0_4 = arith.constant 0 : index
    %3 = vector.load %arg2[%c0_3, %c0_4] : memref<256x64xbf16, #tpu.memory_space<vmem>>, vector<256x64xbf16>
    %c0_5 = arith.constant 0 : index
    %c0_6 = arith.constant 0 : index
    %4 = vector.load %arg4[%c0_5, %c0_6] : memref<64x128xbf16, #tpu.memory_space<vmem>>, vector<64x128xbf16>
    %cst_7 = arith.constant dense<0.000000e+00> : vector<256x128xf32>
    %5 = tpu.matmul %3, %4, %cst_7 {dimension_numbers = #tpu.dot_dimension_numbers<[1], [0], [0], [1], [0, 0, 1, 1], [], []>} : vector<256x64xbf16>, vector<64x128xbf16>, vector<256x128xf32> -> vector<256x128xf32>
    %6 = arith.addf %2, %5 : vector<256x128xf32>
    %c0_8 = arith.constant 0 : index
    %c0_9 = arith.constant 0 : index
    %7 = vector.load %arg5[%c0_8, %c0_9] : memref<1x128xf32, #tpu.memory_space<vmem>>, vector<1x128xf32>
    %8 = vector.broadcast %7 : vector<1x128xf32> to vector<256x128xf32>
    %9 = arith.addf %6, %8 : vector<256x128xf32>
    %c0_10 = arith.constant 0 : index
    %c0_11 = arith.constant 0 : index
    %10 = vector.load %arg9[%c0_10, %c0_11] : memref<256x128xf32, #tpu.memory_space<vmem>>, vector<256x128xf32>
    tpu.vector_store %arg9[%c0_10, %c0_11], %9 {strides = array<i32>} : memref<256x128xf32, #tpu.memory_space<vmem>>, vector<256x128xf32>,
    %11 = arith.truncf %9 : vector<256x128xf32> to vector<256x128xbf16>
    %12 = tpu.iota {dimensions = array<i32: 1>} : vector<8x256xi32>
    %c0_12 = arith.constant 0 : index
    %c0_13 = arith.constant 0 : index
    %13 = vector.load %arg6[%c0_12, %c0_13] : memref<8x1xi32, #tpu.memory_space<vmem>>, vector<8x1xi32>
    %14 = vector.broadcast %13 : vector<8x1xi32> to vector<8x256xi32>
    %15 = arith.cmpi eq, %12, %14 : vector<8x256xi32>
    %cst_14 = arith.constant 1.000000e+00 : f32
    %cst_15 = arith.constant 0.000000e+00 : f32
    %16 = vector.broadcast %cst_14 : f32 to vector<8x256xf32>
    %17 = vector.broadcast %cst_15 : f32 to vector<8x256xf32>
    %18 = arith.select %15, %16, %17 : vector<8x256xi1>, vector<8x256xf32>
    %19 = arith.truncf %18 : vector<8x256xf32> to vector<8x256xbf16>
    %c0_16 = arith.constant 0 : index
    %c0_17 = arith.constant 0 : index
    %20 = vector.load %arg7[%c0_16, %c0_17] : memref<8x1xi32, #tpu.memory_space<vmem>>, vector<8x1xi32>
    %21 = vector.broadcast %20 : vector<8x1xi32> to vector<8x256xi32>
    %22 = arith.cmpi eq, %12, %21 : vector<8x256xi32>
    %cst_18 = arith.constant 1.000000e+00 : f32
    %cst_19 = arith.constant 0.000000e+00 : f32
    %23 = vector.broadcast %cst_18 : f32 to vector<8x256xf32>
    %24 = vector.broadcast %cst_19 : f32 to vector<8x256xf32>
    %25 = arith.select %22, %23, %24 : vector<8x256xi1>, vector<8x256xf32>
    %cst_20 = arith.constant dense<0.000000e+00> : vector<8x128xf32>
    %26 = tpu.matmul %19, %11, %cst_20 {dimension_numbers = #tpu.dot_dimension_numbers<[1], [0], [0], [1], [0, 0, 1, 1], [], []>} : vector<8x256xbf16>, vector<256x128xbf16>, vector<8x128xf32> -> vector<8x128xf32>
    %27 = arith.truncf %26 : vector<8x128xf32> to vector<8x128xbf16>
    %cst_21 = arith.constant dense<0.000000e+00> : vector<8x256xf32>
    %28 = tpu.matmul %27, %11, %cst_21 {dimension_numbers = #tpu.dot_dimension_numbers<[1], [1], [0], [0], [0, 0, 1, 0], [], []>} : vector<8x128xbf16>, vector<256x128xbf16>, vector<8x256xf32> -> vector<8x256xf32>
    %29 = arith.mulf %28, %25 : vector<8x256xf32>
    %cst_22 = arith.constant dense<0.000000e+00> : vector<8xf32>
    %30 = vector.multi_reduction <add>, %29, %cst_22 [1] : vector<8x256xf32> to vector<8xf32>
    %31 = vector.shape_cast %30 : vector<8xf32> to vector<8x1xf32>
    %32 = tpu.iota {dimensions = array<i32: 0>} : vector<256x128xi32>
    %c0_23 = arith.constant 0 : index
    %c0_24 = arith.constant 0 : index
    %33 = vector.load %arg8[%c0_23, %c0_24] : memref<1x128xi32, #tpu.memory_space<vmem>>, vector<1x128xi32>
    %34 = vector.broadcast %33 : vector<1x128xi32> to vector<256x128xi32>
    %35 = arith.cmpi eq, %32, %34 : vector<256x128xi32>
    %cst_25 = arith.constant 1.000000e+00 : f32
    %cst_26 = arith.constant 0.000000e+00 : f32
    %36 = vector.broadcast %cst_25 : f32 to vector<256x128xf32>
    %37 = vector.broadcast %cst_26 : f32 to vector<256x128xf32>
    %38 = arith.select %35, %36, %37 : vector<256x128xi1>, vector<256x128xf32>
    %cst_27 = arith.constant dense<0.000000e+00> : vector<8x128xf32>
    %39 = tpu.matmul %28, %38, %cst_27 {dimension_numbers = #tpu.dot_dimension_numbers<[1], [0], [0], [1], [0, 0, 1, 1], [], []>} : vector<8x256xf32>, vector<256x128xf32>, vector<8x128xf32> -> vector<8x128xf32>
    %40 = vector.broadcast %31 : vector<8x1xf32> to vector<8x128xf32>
    %41 = arith.subf %39, %40 : vector<8x128xf32>
    %cst_28 = arith.constant 1.000000e-01 : f32
    %42 = vector.broadcast %cst_28 : f32 to vector<8x128xf32>
    %43 = arith.addf %41, %42 : vector<8x128xf32>
    %cst_29 = arith.constant 0.000000e+00 : f32
    %44 = vector.broadcast %cst_29 : f32 to vector<8x128xf32>
    %45 = arith.maximumf %43, %44 : vector<8x128xf32>
    %cst_30 = arith.constant dense<0.000000e+00> : vector<8xf32>
    %46 = vector.multi_reduction <add>, %45, %cst_30 [1] : vector<8x128xf32> to vector<8xf32>
    %47 = vector.shape_cast %46 : vector<8xf32> to vector<8x1xf32>
    %cst_31 = arith.constant 7.812500e-03 : f32
    %48 = vector.broadcast %cst_31 : f32 to vector<8x1xf32>
    %49 = arith.mulf %47, %48 : vector<8x1xf32>
    %cst_32 = arith.constant dense<0.000000e+00> : vector<1xf32>
    %50 = vector.multi_reduction <add>, %49, %cst_32 [0] : vector<8x1xf32> to vector<1xf32>
    %51 = vector.shape_cast %50 : vector<1xf32> to vector<1x1xf32>
    %c0_33 = arith.constant 0 : index
    %c0_34 = arith.constant 0 : index
    %52 = vector.load %arg10[%c0_33, %c0_34] : memref<1x1xf32, #tpu.memory_space<vmem>>, vector<1x1xf32>
    tpu.vector_store %arg10[%c0_33, %c0_34], %51 {strides = array<i32>} : memref<1x1xf32, #tpu.memory_space<vmem>>, vector<1x1xf32>,
    return
  }
  func.func @transform_0(%arg0: i32) -> (i32, i32) {
    %c0_i32 = arith.constant 0 : i32
    %c0_i32_0 = arith.constant 0 : i32
    %c0_i32_1 = arith.constant 0 : i32
    return %c0_i32, %c0_i32_0 : i32, i32
  }
  func.func @transform_1(%arg0: i32) -> (i32, i32) {
    %c0_i32 = arith.constant 0 : i32
    %c0_i32_0 = arith.constant 0 : i32
    %c0_i32_1 = arith.constant 0 : i32
    return %c0_i32, %c0_i32_0 : i32, i32
  }
  func.func @transform_2(%arg0: i32) -> (i32, i32) {
    %c0_i32 = arith.constant 0 : i32
    %c0_i32_0 = arith.constant 0 : i32
    %c0_i32_1 = arith.constant 0 : i32
    return %c0_i32, %c0_i32_0 : i32, i32
  }
  func.func @transform_3(%arg0: i32) -> (i32, i32) {
    %c0_i32 = arith.constant 0 : i32
    %c0_i32_0 = arith.constant 0 : i32
    %c0_i32_1 = arith.constant 0 : i32
    return %c0_i32, %c0_i32_0 : i32, i32
  }
  func.func @transform_4(%arg0: i32) -> (i32, i32) {
    %c0_i32 = arith.constant 0 : i32
    %c0_i32_0 = arith.constant 0 : i32
    %c0_i32_1 = arith.constant 0 : i32
    return %c0_i32, %c0_i32_0 : i32, i32
  }
  func.func @transform_5(%arg0: i32) -> (i32, i32) {
    %c0_i32 = arith.constant 0 : i32
    %c0_i32_0 = arith.constant 0 : i32
    %c0_i32_1 = arith.constant 0 : i32
    return %c0_i32, %c0_i32_0 : i32, i32
  }
  func.func @transform_6(%arg0: i32) -> (i32, i32) {
    %c0_i32 = arith.constant 0 : i32
    %c0_i32_0 = arith.constant 0 : i32
    %c0_i32_1 = arith.constant 0 : i32
    return %c0_i32, %c0_i32_0 : i32, i32
  }
  func.func @transform_7(%arg0: i32) -> (i32, i32) {
    %c0_i32 = arith.constant 0 : i32
    %c0_i32_0 = arith.constant 0 : i32
    %c0_i32_1 = arith.constant 0 : i32
    return %c0_i32, %c0_i32_0 : i32, i32
  }
  func.func @transform_8(%arg0: i32) -> (i32, i32) {
    %c0_i32 = arith.constant 0 : i32
    %c0_i32_0 = arith.constant 0 : i32
    %c0_i32_1 = arith.constant 0 : i32
    return %c0_i32, %c0_i32_0 : i32, i32
  }
  func.func @transform_9(%arg0: i32) -> (i32, i32) {
    %c0_i32 = arith.constant 0 : i32
    %c0_i32_0 = arith.constant 0 : i32
    %c0_i32_1 = arith.constant 0 : i32
    return %c0_i32, %c0_i32_0 : i32, i32
  }
}

</mosaic_0001>

<llo_original>
// kernel: hetegraphrec_forward.1
$region0: #{hetegraphrec_forward.1}
  #allocation0 [shape = 'u32[]', space=smem, size = 0x4, offset = 0x4, fixed_abs, tag = 'smem constant byte address 0x4 - core index']
  #allocation1 [shape = 'u32[72,128]{1,0:T(1,128)}', space=vmem, size = 0x9000, scoped, tag = 'internal scratch']
  %s0 = inlined_call_operand.vmem [shape: bf16[256,64], index: 0, kind: input, shape index: {}]
  %s1 = inlined_call_operand.vmem [shape: bf16[256,64], index: 1, kind: input, shape index: {}]
  %s2 = inlined_call_operand.vmem [shape: bf16[64,128], index: 2, kind: input, shape index: {}]
  %s3 = inlined_call_operand.vmem [shape: bf16[64,128], index: 3, kind: input, shape index: {}]
  %s4 = inlined_call_operand.vmem [shape: f32[1,128], index: 4, kind: input, shape index: {}]
  %s5 = inlined_call_operand.vmem [shape: s32[8,1], index: 5, kind: input, shape index: {}]
  %s6 = inlined_call_operand.vmem [shape: s32[8,1], index: 6, kind: input, shape index: {}]
  %s7 = inlined_call_operand.vmem [shape: s32[1,128], index: 7, kind: input, shape index: {}]
  %s8 = inlined_call_operand.hbm [shape: f32[256,128], index: 8, kind: output, shape index: {0}]
  %s9 = inlined_call_operand.hbm [shape: f32[1,1], index: 9, kind: output, shape index: {1}]
  %10 = xla_tuple %s8, %s9
  %s11 = sld [smem:[#allocation0]]
  $region50: #{hetegraphrec_forward.1} parent=0
    _
  %s13 = ssub.s32 1, %s11
  %s14 = scalar_select 0, %s13, %s11
  $region1: #{hetegraphrec_forward.1} parent=0
    #allocation2 [shape = 'u8[131072]{0}', space=vmem, size = 0x20000, scoped, tag = 'output window, operand 0, single buffered']
    #allocation3 [shape = 's32[1]{0}', space=sflag, size = 0x4, scoped, tag = 'scoped memory for hetegraphrec_forward.1']
    #allocation4 [shape = 'u8[512]{0}', space=vmem, size = 0x400, scoped, tag = 'output window, operand 1, single buffered']
    #allocation5 [shape = 's32[1]{0}', space=sflag, size = 0x4, scoped, tag = 'scoped memory for hetegraphrec_forward.1']
    %15 = vsyncpa [#allocation3], 0
    %16 = vsyncpa [#allocation5], 0
    // Predicated region
    $region2: #{hetegraphrec_forward.1} parent=1 // pred_check
      _
    $region3: #{hetegraphrec_forward.1} parent=1 // pred_check_branch
      %18 = sbr.rel (0) target = $region5
    $region4: #{hetegraphrec_forward.1} parent=1 // pred_region
      _
    $region5: #{hetegraphrec_forward.1} parent=1 // pred_fallthru
      _
    // Predicated region
    $region6: #{hetegraphrec_forward.1} parent=1 // pred_check
      _
    $region7: #{hetegraphrec_forward.1} parent=1 // pred_check_branch
      %20 = sbr.rel (0) target = $region9
    $region8: #{hetegraphrec_forward.1} parent=1 // pred_region
      _
    $region9: #{hetegraphrec_forward.1} parent=1 // pred_fallthru
      _
    // Predicated region
    $region10: #{hetegraphrec_forward.1} parent=1 // pred_check
      _
    $region11: #{hetegraphrec_forward.1} parent=1 // pred_check_branch
      %22 = sbr.rel (0) target = $region13
    $region12: #{hetegraphrec_forward.1} parent=1 // pred_region
      _
    $region13: #{hetegraphrec_forward.1} parent=1 // pred_fallthru
      _
    // Predicated region
    $region14: #{hetegraphrec_forward.1} parent=1 // pred_check
      _
    $region15: #{hetegraphrec_forward.1} parent=1 // pred_check_branch
      %24 = sbr.rel (0) target = $region17
    $region16: #{hetegraphrec_forward.1} parent=1 // pred_region
      _
    $region17: #{hetegraphrec_forward.1} parent=1 // pred_fallthru
      _
    // Predicated region
    $region18: #{hetegraphrec_forward.1} parent=1 // pred_check
      _
    $region19: #{hetegraphrec_forward.1} parent=1 // pred_check_branch
      %26 = sbr.rel (0) target = $region21
    $region20: #{hetegraphrec_forward.1} parent=1 // pred_region
      _
    $region21: #{hetegraphrec_forward.1} parent=1 // pred_fallthru
      _
    // Predicated region
    $region22: #{hetegraphrec_forward.1} parent=1 // pred_check
      _
    $region23: #{hetegraphrec_forward.1} parent=1 // pred_check_branch
      %28 = sbr.rel (0) target = $region25
    $region24: #{hetegraphrec_forward.1} parent=1 // pred_region
      _
    $region25: #{hetegraphrec_forward.1} parent=1 // pred_fallthru
      _
    // Predicated region
    $region26: #{hetegraphrec_forward.1} parent=1 // pred_check
      _
    $region27: #{hetegraphrec_forward.1} parent=1 // pred_check_branch
      %30 = sbr.rel (0) target = $region29
    $region28: #{hetegraphrec_forward.1} parent=1 // pred_region
      _
    $region29: #{hetegraphrec_forward.1} parent=1 // pred_fallthru
      _
    // Predicated region
    $region30: #{hetegraphrec_forward.1} parent=1 // pred_check
      _
    $region31: #{hetegraphrec_forward.1} parent=1 // pred_check_branch
      %32 = sbr.rel (0) target = $region33
    $region32: #{hetegraphrec_forward.1} parent=1 // pred_region
      _
    $region33: #{hetegraphrec_forward.1} parent=1 // pred_fallthru
      _
    %v34 = vld [vmem:[%s0] sm:$0xf]
    %v35 = vld [vmem:[%s0 + $0x4] sm:$0xf]
    %v36 = vld [vmem:[%s0 + $0x8] sm:$0xf]
    %v37 = vld [vmem:[%s0 + $0xc] sm:$0xf]
    %v38 = vld [vmem:[%s0 + $0x10] sm:$0xf]
    %v39 = vld [vmem:[%s0 + $0x14] sm:$0xf]
    %v40 = vld [vmem:[%s0 + $0x18] sm:$0xf]
    %v41 = vld [vmem:[%s0 + $0x1c] sm:$0xf]
    %v42 = vld [vmem:[%s0 + $0x20] sm:$0xf]
    %v43 = vld [vmem:[%s0 + $0x24] sm:$0xf]
    %v44 = vld [vmem:[%s0 + $0x28] sm:$0xf]
    %v45 = vld [vmem:[%s0 + $0x2c] sm:$0xf]
    %v46 = vld [vmem:[%s0 + $0x30] sm:$0xf]
    %v47 = vld [vmem:[%s0 + $0x34] sm:$0xf]
    %v48 = vld [vmem:[%s0 + $0x38] sm:$0xf]
    %v49 = vld [vmem:[%s0 + $0x3c] sm:$0xf]
    %v50 = vld [vmem:[%s0 + $0x40] sm:$0xf]
    %v51 = vld [vmem:[%s0 + $0x44] sm:$0xf]
    %v52 = vld [vmem:[%s0 + $0x48] sm:$0xf]
    %v53 = vld [vmem:[%s0 + $0x4c] sm:$0xf]
    %v54 = vld [vmem:[%s0 + $0x50] sm:$0xf]
    %v55 = vld [vmem:[%s0 + $0x54] sm:$0xf]
    %v56 = vld [vmem:[%s0 + $0x58] sm:$0xf]
    %v57 = vld [vmem:[%s0 + $0x5c] sm:$0xf]
    %v58 = vld [vmem:[%s0 + $0x60] sm:$0xf]
    %v59 = vld [vmem:[%s0 + $0x64] sm:$0xf]
    %v60 = vld [vmem:[%s0 + $0x68] sm:$0xf]
    %v61 = vld [vmem:[%s0 + $0x6c] sm:$0xf]
    %v62 = vld [vmem:[%s0 + $0x70] sm:$0xf]
    %v63 = vld [vmem:[%s0 + $0x74] sm:$0xf]
    %v64 = vld [vmem:[%s0 + $0x78] sm:$0xf]
    %v65 = vld [vmem:[%s0 + $0x7c] sm:$0xf]
    %v66 = vld [vmem:[%s2] sm:$0xf]
    %v67 = vld [vmem:[%s2 + $0x4] sm:$0xf]
    %v68 = vld [vmem:[%s2 + $0x8] sm:$0xf]
    %v69 = vld [vmem:[%s2 + $0xc] sm:$0xf]
    %v70 = vld [vmem:[%s2 + $0x10] sm:$0xf]
    %v71 = vld [vmem:[%s2 + $0x14] sm:$0xf]
    %v72 = vld [vmem:[%s2 + $0x18] sm:$0xf]
    %v73 = vld [vmem:[%s2 + $0x1c] sm:$0xf]
    %v74 = vld [vmem:[%s1] sm:$0xf]
    %v75 = vld [vmem:[%s1 + $0x4] sm:$0xf]
    %v76 = vld [vmem:[%s1 + $0x8] sm:$0xf]
    %v77 = vld [vmem:[%s1 + $0xc] sm:$0xf]
    %v78 = vld [vmem:[%s1 + $0x10] sm:$0xf]
    %v79 = vld [vmem:[%s1 + $0x14] sm:$0xf]
    %v80 = vld [vmem:[%s1 + $0x18] sm:$0xf]
    %v81 = vld [vmem:[%s1 + $0x1c] sm:$0xf]
    %v82 = vld [vmem:[%s1 + $0x20] sm:$0xf]
    %v83 = vld [vmem:[%s1 + $0x24] sm:$0xf]
    %v84 = vld [vmem:[%s1 + $0x28] sm:$0xf]
    %v85 = vld [vmem:[%s1 + $0x2c] sm:$0xf]
    %v86 = vld [vmem:[%s1 + $0x30] sm:$0xf]
    %v87 = vld [vmem:[%s1 + $0x34] sm:$0xf]
    %v88 = vld [vmem:[%s1 + $0x38] sm:$0xf]
    %v89 = vld [vmem:[%s1 + $0x3c] sm:$0xf]
    %v90 = vld [vmem:[%s1 + $0x40] sm:$0xf]
    %v91 = vld [vmem:[%s1 + $0x44] sm:$0xf]
    %v92 = vld [vmem:[%s1 + $0x48] sm:$0xf]
    %v93 = vld [vmem:[%s1 + $0x4c] sm:$0xf]
    %v94 = vld [vmem:[%s1 + $0x50] sm:$0xf]
    %v95 = vld [vmem:[%s1 + $0x54] sm:$0xf]
    %v96 = vld [vmem:[%s1 + $0x58] sm:$0xf]
    %v97 = vld [vmem:[%s1 + $0x5c] sm:$0xf]
    %v98 = vld [vmem:[%s1 + $0x60] sm:$0xf]
    %v99 = vld [vmem:[%s1 + $0x64] sm:$0xf]
    %v100 = vld [vmem:[%s1 + $0x68] sm:$0xf]
    %v101 = vld [vmem:[%s1 + $0x6c] sm:$0xf]
    %v102 = vld [vmem:[%s1 + $0x70] sm:$0xf]
    %v103 = vld [vmem:[%s1 + $0x74] sm:$0xf]
    %v104 = vld [vmem:[%s1 + $0x78] sm:$0xf]
    %v105 = vld [vmem:[%s1 + $0x7c] sm:$0xf]
    %v106 = vld [vmem:[%s3] sm:$0xf]
    %v107 = vld [vmem:[%s3 + $0x4] sm:$0xf]
    %v108 = vld [vmem:[%s3 + $0x8] sm:$0xf]
    %v109 = vld [vmem:[%s3 + $0xc] sm:$0xf]
    %v110 = vld [vmem:[%s3 + $0x10] sm:$0xf]
    %v111 = vld [vmem:[%s3 + $0x14] sm:$0xf]
    %v112 = vld [vmem:[%s3 + $0x18] sm:$0xf]
    %v113 = vld [vmem:[%s3 + $0x1c] sm:$0xf]
    %v146 = vunpack.c.l.b16 %v74
    %v147 = vunpack.c.l.b16 %v75
    %v148 = vunpack.c.l.b16 %v76
    %v149 = vunpack.c.l.b16 %v77
    %v150 = vunpack.c.l.b16 %v78
    %v151 = vunpack.c.l.b16 %v79
    %v152 = vunpack.c.l.b16 %v80
    %v153 = vunpack.c.l.b16 %v81
    %v154 = vunpack.c.l.b16 %v82
    %v155 = vunpack.c.l.b16 %v83
    %v156 = vunpack.c.l.b16 %v84
    %v157 = vunpack.c.l.b16 %v85
    %v158 = vunpack.c.l.b16 %v86
    %v159 = vunpack.c.l.b16 %v87
    %v160 = vunpack.c.l.b16 %v88
    %v161 = vunpack.c.l.b16 %v89
    %v162 = vunpack.c.l.b16 %v90
    %v163 = vunpack.c.l.b16 %v91
    %v164 = vunpack.c.l.b16 %v92
    %v165 = vunpack.c.l.b16 %v93
    %v166 = vunpack.c.l.b16 %v94
    %v167 = vunpack.c.l.b16 %v95
    %v168 = vunpack.c.l.b16 %v96
    %v169 = vunpack.c.l.b16 %v97
    %v170 = vunpack.c.l.b16 %v98
    %v171 = vunpack.c.l.b16 %v99
    %v172 = vunpack.c.l.b16 %v100
    %v173 = vunpack.c.l.b16 %v101
    %v174 = vunpack.c.l.b16 %v102
    %v175 = vunpack.c.l.b16 %v103
    %v176 = vunpack.c.l.b16 %v104
    %v177 = vunpack.c.l.b16 %v105
    %v178 = vpack.c.b16 %v147, %v146
    %v179 = vpack.c.b16 %v149, %v148
    %v180 = vpack.c.b16 %v151, %v150
    %v181 = vpack.c.b16 %v153, %v152
    %v182 = vpack.c.b16 %v155, %v154
    %v183 = vpack.c.b16 %v157, %v156
    %v184 = vpack.c.b16 %v159, %v158
    %v185 = vpack.c.b16 %v161, %v160
    %v186 = vpack.c.b16 %v163, %v162
    %v187 = vpack.c.b16 %v165, %v164
    %v188 = vpack.c.b16 %v167, %v166
    %v189 = vpack.c.b16 %v169, %v168
    %v190 = vpack.c.b16 %v171, %v170
    %v191 = vpack.c.b16 %v173, %v172
    %v192 = vpack.c.b16 %v175, %v174
    %v193 = vpack.c.b16 %v177, %v176
    %v202 = vunpack.c.l.b16 %v106
    %v203 = vunpack.c.l.b16 %v107
    %v204 = vunpack.c.l.b16 %v108
    %v205 = vunpack.c.l.b16 %v109
    %v206 = vunpack.c.l.b16 %v110
    %v207 = vunpack.c.l.b16 %v111
    %v208 = vunpack.c.l.b16 %v112
    %v209 = vunpack.c.l.b16 %v113
    %v210 = vpack.c.b16 %v203, %v202
    %v211 = vpack.c.b16 %v205, %v204
    %v212 = vpack.c.b16 %v207, %v206
    %v213 = vpack.c.b16 %v209, %v208
    %vm218 = vcmask 523264
    %v220 = vsel %vm218, %v178, 0
    %v223 = vsel %vm218, %v179, 0
    %v226 = vsel %vm218, %v180, 0
    %v229 = vsel %vm218, %v181, 0
    %v232 = vsel %vm218, %v182, 0
    %v235 = vsel %vm218, %v183, 0
    %v238 = vsel %vm218, %v184, 0
    %v241 = vsel %vm218, %v185, 0
    %v244 = vsel %vm218, %v186, 0
    %v247 = vsel %vm218, %v187, 0
    %v250 = vsel %vm218, %v188, 0
    %v253 = vsel %vm218, %v189, 0
    %v256 = vsel %vm218, %v190, 0
    %v259 = vsel %vm218, %v191, 0
    %v262 = vsel %vm218, %v192, 0
    %v265 = vsel %vm218, %v193, 0
    %267 = vmatpush.bf16.msra.mxu0 0
    %268 = vmatpush.bf16.msra.mxu0 0
    %269 = vmatpush.bf16.msra.mxu0 0
    %270 = vmatpush.bf16.msra.mxu0 0
    %271 = vmatpush.bf16.msra.mxu0 %v213
    %272 = vmatpush.bf16.msra.mxu0 %v212
    %273 = vmatpush.bf16.msra.mxu0 %v211
    %274 = vmatpush.bf16.msra.mxu0 %v210
    %275 = vmatmul.bf16.gmra.mxu0 %v220
    %v276 = vpop.f32.mrf.mxu0
    %v277 = vadd.f32 0.0, %v276
    %v278 = vpop.f32.mrf.mxu0
    %v279 = vadd.f32 0.0, %v278
    %280 = vmatmul.bf16.gmra.mxu0 %v223
    %v281 = vpop.f32.mrf.mxu0
    %v282 = vadd.f32 0.0, %v281
    %v283 = vpop.f32.mrf.mxu0
    %v284 = vadd.f32 0.0, %v283
    %285 = vmatmul.bf16.gmra.mxu0 %v226
    %v286 = vpop.f32.mrf.mxu0
    %v287 = vadd.f32 0.0, %v286
    %v288 = vpop.f32.mrf.mxu0
    %v289 = vadd.f32 0.0, %v288
    %290 = vmatmul.bf16.gmra.mxu0 %v229
    %v291 = vpop.f32.mrf.mxu0
    %v292 = vadd.f32 0.0, %v291
    %v293 = vpop.f32.mrf.mxu0
    %v294 = vadd.f32 0.0, %v293
    %295 = vmatmul.bf16.gmra.mxu0 %v232
    %v296 = vpop.f32.mrf.mxu0
    %v297 = vadd.f32 0.0, %v296
    %v298 = vpop.f32.mrf.mxu0
    %v299 = vadd.f32 0.0, %v298
    %300 = vmatmul.bf16.gmra.mxu0 %v235
    %v301 = vpop.f32.mrf.mxu0
    %v302 = vadd.f32 0.0, %v301
    %v303 = vpop.f32.mrf.mxu0
    %v304 = vadd.f32 0.0, %v303
    %305 = vmatmul.bf16.gmra.mxu0 %v238
    %v306 = vpop.f32.mrf.mxu0
    %v307 = vadd.f32 0.0, %v306
    %v308 = vpop.f32.mrf.mxu0
    %v309 = vadd.f32 0.0, %v308
    %310 = vmatmul.bf16.gmra.mxu0 %v241
    %v311 = vpop.f32.mrf.mxu0
    %v312 = vadd.f32 0.0, %v311
    %v313 = vpop.f32.mrf.mxu0
    %v314 = vadd.f32 0.0, %v313
    %315 = vmatmul.bf16.gmra.mxu0 %v244
    %v316 = vpop.f32.mrf.mxu0
    %v317 = vadd.f32 0.0, %v316
    %v318 = vpop.f32.mrf.mxu0
    %v319 = vadd.f32 0.0, %v318
    %320 = vmatmul.bf16.gmra.mxu0 %v247
    %v321 = vpop.f32.mrf.mxu0
    %v322 = vadd.f32 0.0, %v321
    %v323 = vpop.f32.mrf.mxu0
    %v324 = vadd.f32 0.0, %v323
    %325 = vmatmul.bf16.gmra.mxu0 %v250
    %v326 = vpop.f32.mrf.mxu0
    %v327 = vadd.f32 0.0, %v326
    %v328 = vpop.f32.mrf.mxu0
    %v329 = vadd.f32 0.0, %v328
    %330 = vmatmul.bf16.gmra.mxu0 %v253
    %v331 = vpop.f32.mrf.mxu0
    %v332 = vadd.f32 0.0, %v331
    %v333 = vpop.f32.mrf.mxu0
    %v334 = vadd.f32 0.0, %v333
    %335 = vmatmul.bf16.gmra.mxu0 %v256
    %v336 = vpop.f32.mrf.mxu0
    %v337 = vadd.f32 0.0, %v336
    %v338 = vpop.f32.mrf.mxu0
    %v339 = vadd.f32 0.0, %v338
    %340 = vmatmul.bf16.gmra.mxu0 %v259
    %v341 = vpop.f32.mrf.mxu0
    %v342 = vadd.f32 0.0, %v341
    %v343 = vpop.f32.mrf.mxu0
    %v344 = vadd.f32 0.0, %v343
    %345 = vmatmul.bf16.gmra.mxu0 %v262
    %v346 = vpop.f32.mrf.mxu0
    %v347 = vadd.f32 0.0, %v346
    %v348 = vpop.f32.mrf.mxu0
    %v349 = vadd.f32 0.0, %v348
    %350 = vmatmul.bf16.gmra.mxu0 %v265
    %v351 = vpop.f32.mrf.mxu0
    %v352 = vadd.f32 0.0, %v351
    %v353 = vpop.f32.mrf.mxu0
    %v354 = vadd.f32 0.0, %v353
    %355 = vdwg.mxu0
    %v388 = vunpack.c.l.b16 %v34
    %v389 = vunpack.c.l.b16 %v35
    %v390 = vunpack.c.l.b16 %v36
    %v391 = vunpack.c.l.b16 %v37
    %v392 = vunpack.c.l.b16 %v38
    %v393 = vunpack.c.l.b16 %v39
    %v394 = vunpack.c.l.b16 %v40
    %v395 = vunpack.c.l.b16 %v41
    %v396 = vunpack.c.l.b16 %v42
    %v397 = vunpack.c.l.b16 %v43
    %v398 = vunpack.c.l.b16 %v44
    %v399 = vunpack.c.l.b16 %v45
    %v400 = vunpack.c.l.b16 %v46
    %v401 = vunpack.c.l.b16 %v47
    %v402 = vunpack.c.l.b16 %v48
    %v403 = vunpack.c.l.b16 %v49
    %v404 = vunpack.c.l.b16 %v50
    %v405 = vunpack.c.l.b16 %v51
    %v406 = vunpack.c.l.b16 %v52
    %v407 = vunpack.c.l.b16 %v53
    %v408 = vunpack.c.l.b16 %v54
    %v409 = vunpack.c.l.b16 %v55
    %v410 = vunpack.c.l.b16 %v56
    %v411 = vunpack.c.l.b16 %v57
    %v412 = vunpack.c.l.b16 %v58
    %v413 = vunpack.c.l.b16 %v59
    %v414 = vunpack.c.l.b16 %v60
    %v415 = vunpack.c.l.b16 %v61
    %v416 = vunpack.c.l.b16 %v62
    %v417 = vunpack.c.l.b16 %v63
    %v418 = vunpack.c.l.b16 %v64
    %v419 = vunpack.c.l.b16 %v65
    %v420 = vpack.c.b16 %v389, %v388
    %v421 = vpack.c.b16 %v391, %v390
    %v422 = vpack.c.b16 %v393, %v392
    %v423 = vpack.c.b16 %v395, %v394
    %v424 = vpack.c.b16 %v397, %v396
    %v425 = vpack.c.b16 %v399, %v398
    %v426 = vpack.c.b16 %v401, %v400
    %v427 = vpack.c.b16 %v403, %v402
    %v428 = vpack.c.b16 %v405, %v404
    %v429 = vpack.c.b16 %v407, %v406
    %v430 = vpack.c.b16 %v409, %v408
    %v431 = vpack.c.b16 %v411, %v410
    %v432 = vpack.c.b16 %v413, %v412
    %v433 = vpack.c.b16 %v415, %v414
    %v434 = vpack.c.b16 %v417, %v416
    %v435 = vpack.c.b16 %v419, %v418
    %v444 = vunpack.c.l.b16 %v66
    %v445 = vunpack.c.l.b16 %v67
    %v446 = vunpack.c.l.b16 %v68
    %v447 = vunpack.c.l.b16 %v69
    %v448 = vunpack.c.l.b16 %v70
    %v449 = vunpack.c.l.b16 %v71
    %v450 = vunpack.c.l.b16 %v72
    %v451 = vunpack.c.l.b16 %v73
    %v452 = vpack.c.b16 %v445, %v444
    %v453 = vpack.c.b16 %v447, %v446
    %v454 = vpack.c.b16 %v449, %v448
    %v455 = vpack.c.b16 %v451, %v450
    %v461 = vsel %vm218, %v420, 0
    %v464 = vsel %vm218, %v421, 0
    %v467 = vsel %vm218, %v422, 0
    %v470 = vsel %vm218, %v423, 0
    %v473 = vsel %vm218, %v424, 0
    %v476 = vsel %vm218, %v425, 0
    %v479 = vsel %vm218, %v426, 0
    %v482 = vsel %vm218, %v427, 0
    %v485 = vsel %vm218, %v428, 0
    %v488 = vsel %vm218, %v429, 0
    %v491 = vsel %vm218, %v430, 0
    %v494 = vsel %vm218, %v431, 0
    %v497 = vsel %vm218, %v432, 0
    %v500 = vsel %vm218, %v433, 0
    %v503 = vsel %vm218, %v434, 0
    %v506 = vsel %vm218, %v435, 0
    %508 = vmatpush.bf16.msra.mxu0 0
    %509 = vmatpush.bf16.msra.mxu0 0
    %510 = vmatpush.bf16.msra.mxu0 0
    %511 = vmatpush.bf16.msra.mxu0 0
    %512 = vmatpush.bf16.msra.mxu0 %v455
    %513 = vmatpush.bf16.msra.mxu0 %v454
    %514 = vmatpush.bf16.msra.mxu0 %v453
    %515 = vmatpush.bf16.msra.mxu0 %v452
    %516 = vmatmul.bf16.gmra.mxu0 %v461
    %v517 = vpop.f32.mrf.mxu0
    %v518 = vadd.f32 %v277, %v517
    %v519 = vpop.f32.mrf.mxu0
    %v520 = vadd.f32 %v279, %v519
    %521 = vmatmul.bf16.gmra.mxu0 %v464
    %v522 = vpop.f32.mrf.mxu0
    %v523 = vadd.f32 %v282, %v522
    %v524 = vpop.f32.mrf.mxu0
    %v525 = vadd.f32 %v284, %v524
    %526 = vmatmul.bf16.gmra.mxu0 %v467
    %v527 = vpop.f32.mrf.mxu0
    %v528 = vadd.f32 %v287, %v527
    %v529 = vpop.f32.mrf.mxu0
    %v530 = vadd.f32 %v289, %v529
    %531 = vmatmul.bf16.gmra.mxu0 %v470
    %v532 = vpop.f32.mrf.mxu0
    %v533 = vadd.f32 %v292, %v532
    %v534 = vpop.f32.mrf.mxu0
    %v535 = vadd.f32 %v294, %v534
    %536 = vmatmul.bf16.gmra.mxu0 %v473
    %v537 = vpop.f32.mrf.mxu0
    %v538 = vadd.f32 %v297, %v537
    %v539 = vpop.f32.mrf.mxu0
    %v540 = vadd.f32 %v299, %v539
    %541 = vmatmul.bf16.gmra.mxu0 %v476
    %v542 = vpop.f32.mrf.mxu0
    %v543 = vadd.f32 %v302, %v542
    %v544 = vpop.f32.mrf.mxu0
    %v545 = vadd.f32 %v304, %v544
    %546 = vmatmul.bf16.gmra.mxu0 %v479
    %v547 = vpop.f32.mrf.mxu0
    %v548 = vadd.f32 %v307, %v547
    %v549 = vpop.f32.mrf.mxu0
    %v550 = vadd.f32 %v309, %v549
    %551 = vmatmul.bf16.gmra.mxu0 %v482
    %v552 = vpop.f32.mrf.mxu0
    %v553 = vadd.f32 %v312, %v552
    %v554 = vpop.f32.mrf.mxu0
    %v555 = vadd.f32 %v314, %v554
    %556 = vmatmul.bf16.gmra.mxu0 %v485
    %v557 = vpop.f32.mrf.mxu0
    %v558 = vadd.f32 %v317, %v557
    %v559 = vpop.f32.mrf.mxu0
    %v560 = vadd.f32 %v319, %v559
    %561 = vmatmul.bf16.gmra.mxu0 %v488
    %v562 = vpop.f32.mrf.mxu0
    %v563 = vadd.f32 %v322, %v562
    %v564 = vpop.f32.mrf.mxu0
    %v565 = vadd.f32 %v324, %v564
    %566 = vmatmul.bf16.gmra.mxu0 %v491
    %v567 = vpop.f32.mrf.mxu0
    %v568 = vadd.f32 %v327, %v567
    %v569 = vpop.f32.mrf.mxu0
    %v570 = vadd.f32 %v329, %v569
    %571 = vmatmul.bf16.gmra.mxu0 %v494
    %v572 = vpop.f32.mrf.mxu0
    %v573 = vadd.f32 %v332, %v572
    %v574 = vpop.f32.mrf.mxu0
    %v575 = vadd.f32 %v334, %v574
    %576 = vmatmul.bf16.gmra.mxu0 %v497
    %v577 = vpop.f32.mrf.mxu0
    %v578 = vadd.f32 %v337, %v577
    %v579 = vpop.f32.mrf.mxu0
    %v580 = vadd.f32 %v339, %v579
    %581 = vmatmul.bf16.gmra.mxu0 %v500
    %v582 = vpop.f32.mrf.mxu0
    %v583 = vadd.f32 %v342, %v582
    %v584 = vpop.f32.mrf.mxu0
    %v585 = vadd.f32 %v344, %v584
    %586 = vmatmul.bf16.gmra.mxu0 %v503
    %v587 = vpop.f32.mrf.mxu0
    %v588 = vadd.f32 %v347, %v587
    %v589 = vpop.f32.mrf.mxu0
    %v590 = vadd.f32 %v349, %v589
    %591 = vmatmul.bf16.gmra.mxu0 %v506
    %v592 = vpop.f32.mrf.mxu0
    %v593 = vadd.f32 %v352, %v592
    %v594 = vpop.f32.mrf.mxu0
    %v595 = vadd.f32 %v354, %v594
    %596 = vdwg.mxu0
    %v597 = vld [vmem:[%s4] sm:$0x1]
    %v599 = vperm.slane %v597, 0
    %v601 = vadd.f32 %v518, %v599
    %v602 = vadd.f32 %v520, %v599
    %v603 = vadd.f32 %v523, %v599
    %v604 = vadd.f32 %v525, %v599
    %v605 = vadd.f32 %v528, %v599
    %v606 = vadd.f32 %v530, %v599
    %v607 = vadd.f32 %v533, %v599
    %v608 = vadd.f32 %v535, %v599
    %v609 = vadd.f32 %v538, %v599
    %v610 = vadd.f32 %v540, %v599
    %v611 = vadd.f32 %v543, %v599
    %v612 = vadd.f32 %v545, %v599
    %v613 = vadd.f32 %v548, %v599
    %v614 = vadd.f32 %v550, %v599
    %v615 = vadd.f32 %v553, %v599
    %v616 = vadd.f32 %v555, %v599
    %v617 = vadd.f32 %v558, %v599
    %v618 = vadd.f32 %v560, %v599
    %v619 = vadd.f32 %v563, %v599
    %v620 = vadd.f32 %v565, %v599
    %v621 = vadd.f32 %v568, %v599
    %v622 = vadd.f32 %v570, %v599
    %v623 = vadd.f32 %v573, %v599
    %v624 = vadd.f32 %v575, %v599
    %v625 = vadd.f32 %v578, %v599
    %v626 = vadd.f32 %v580, %v599
    %v627 = vadd.f32 %v583, %v599
    %v628 = vadd.f32 %v585, %v599
    %v629 = vadd.f32 %v588, %v599
    %v630 = vadd.f32 %v590, %v599
    %v631 = vadd.f32 %v593, %v599
    %v632 = vadd.f32 %v595, %v599
    %633 = vst [vmem:[#allocation2] sm:$0xff] %v601
    %634 = vst [vmem:[#allocation2 + $0x8] sm:$0xff] %v602
    %635 = vst [vmem:[#allocation2 + $0x10] sm:$0xff] %v603
    %636 = vst [vmem:[#allocation2 + $0x18] sm:$0xff] %v604
    %637 = vst [vmem:[#allocation2 + $0x20] sm:$0xff] %v605
    %638 = vst [vmem:[#allocation2 + $0x28] sm:$0xff] %v606
    %639 = vst [vmem:[#allocation2 + $0x30] sm:$0xff] %v607
    %640 = vst [vmem:[#allocation2 + $0x38] sm:$0xff] %v608
    %641 = vst [vmem:[#allocation2 + $0x40] sm:$0xff] %v609
    %642 = vst [vmem:[#allocation2 + $0x48] sm:$0xff] %v610
    %643 = vst [vmem:[#allocation2 + $0x50] sm:$0xff] %v611
    %644 = vst [vmem:[#allocation2 + $0x58] sm:$0xff] %v612
    %645 = vst [vmem:[#allocation2 + $0x60] sm:$0xff] %v613
    %646 = vst [vmem:[#allocation2 + $0x68] sm:$0xff] %v614
    %647 = vst [vmem:[#allocation2 + $0x70] sm:$0xff] %v615
    %648 = vst [vmem:[#allocation2 + $0x78] sm:$0xff] %v616
    %649 = vst [vmem:[#allocation2 + $0x80] sm:$0xff] %v617
    %650 = vst [vmem:[#allocation2 + $0x88] sm:$0xff] %v618
    %651 = vst [vmem:[#allocation2 + $0x90] sm:$0xff] %v619
    %652 = vst [vmem:[#allocation2 + $0x98] sm:$0xff] %v620
    %653 = vst [vmem:[#allocation2 + $0xa0] sm:$0xff] %v621
    %654 = vst [vmem:[#allocation2 + $0xa8] sm:$0xff] %v622
    %655 = vst [vmem:[#allocation2 + $0xb0] sm:$0xff] %v623
    %656 = vst [vmem:[#allocation2 + $0xb8] sm:$0xff] %v624
    %657 = vst [vmem:[#allocation2 + $0xc0] sm:$0xff] %v625
    %658 = vst [vmem:[#allocation2 + $0xc8] sm:$0xff] %v626
    %659 = vst [vmem:[#allocation2 + $0xd0] sm:$0xff] %v627
    %660 = vst [vmem:[#allocation2 + $0xd8] sm:$0xff] %v628
    %661 = vst [vmem:[#allocation2 + $0xe0] sm:$0xff] %v629
    %662 = vst [vmem:[#allocation2 + $0xe8] sm:$0xff] %v630
    %663 = vst [vmem:[#allocation2 + $0xf0] sm:$0xff] %v631
    %664 = vst [vmem:[#allocation2 + $0xf8] sm:$0xff] %v632
    %v665 = vpack.c.bf16 %v602, %v601
    %v666 = vpack.c.bf16 %v604, %v603
    %v667 = vpack.c.bf16 %v606, %v605
    %v668 = vpack.c.bf16 %v608, %v607
    %v669 = vpack.c.bf16 %v610, %v609
    %v670 = vpack.c.bf16 %v612, %v611
    %v671 = vpack.c.bf16 %v614, %v613
    %v672 = vpack.c.bf16 %v616, %v615
    %v673 = vpack.c.bf16 %v618, %v617
    %v674 = vpack.c.bf16 %v620, %v619
    %v675 = vpack.c.bf16 %v622, %v621
    %v676 = vpack.c.bf16 %v624, %v623
    %v677 = vpack.c.bf16 %v626, %v625
    %v678 = vpack.c.bf16 %v628, %v627
    %v679 = vpack.c.bf16 %v630, %v629
    %v680 = vpack.c.bf16 %v632, %v631
    %v681 = vlaneseq
    %v682 = vand.u32 %v681, 127
    %v683 = vadd.s32 %v682, 128
    %v684 = vld [vmem:[%s5] sm:$0xff]
    %685 = vset.pattern.permute.xlu0 0
    %686 = vperm.xlu0 %685, %v684
    %v687 = vpop.permute.xlu0 %686
    %vm688 = vcmp.eq.s32.totalorder %v682, %v687
    %vm689 = vcmp.eq.s32.totalorder %v683, %v687
    %v690 = vsel %vm688, 1.0, 0.0
    %v691 = vsel %vm689, 1.0, 0.0
    %v692 = vpack.c.bf16 %v690, %v690
    %v693 = vpack.c.bf16 %v691, %v691
    %v694 = vld [vmem:[%s6] sm:$0xff]
    %695 = vset.pattern.permute.xlu0 0
    %696 = vperm.xlu0 %695, %v694
    %v697 = vpop.permute.xlu0 %696
    %vm698 = vcmp.eq.s32.totalorder %v682, %v697
    %vm699 = vcmp.eq.s32.totalorder %v683, %v697
    %v700 = vsel %vm698, 1.0, 0.0
    %v701 = vsel %vm699, 1.0, 0.0
    %702 = vmatpush.bf16.msra.mxu0 %v672
    %703 = vmatpush.bf16.msra.mxu0 %v671
    %704 = vmatpush.bf16.msra.mxu0 %v670
    %705 = vmatpush.bf16.msra.mxu0 %v669
    %706 = vmatpush.bf16.msra.mxu0 %v668
    %707 = vmatpush.bf16.msra.mxu0 %v667
    %708 = vmatpush.bf16.msra.mxu0 %v666
    %709 = vmatpush.bf16.msra.mxu0 %v665
    %710 = vmatmul.bf16.gmra.mxu0 %v692
    %v711 = vpop.f32.mrf.mxu0
    %v712 = vadd.f32 0.0, %v711
    %v713 = vpop.f32.mrf.mxu0
    %714 = vdwg.mxu0
    %715 = vmatpush.bf16.msra.mxu0 %v680
    %716 = vmatpush.bf16.msra.mxu0 %v679
    %717 = vmatpush.bf16.msra.mxu0 %v678
    %718 = vmatpush.bf16.msra.mxu0 %v677
    %719 = vmatpush.bf16.msra.mxu0 %v676
    %720 = vmatpush.bf16.msra.mxu0 %v675
    %721 = vmatpush.bf16.msra.mxu0 %v674
    %722 = vmatpush.bf16.msra.mxu0 %v673
    %723 = vmatmul.bf16.gmra.mxu0 %v693
    %v724 = vpop.f32.mrf.mxu0
    %v725 = vadd.f32 %v712, %v724
    %v726 = vpop.f32.mrf.mxu0
    %727 = vdwg.mxu0
    %v728 = vpack.c.bf16 %v725, %v725
    %729 = vmatpush.bf16.xpose.msra.mxu0 %v672
    %730 = vmatpush.bf16.xpose.msra.mxu0 %v671
    %731 = vmatpush.bf16.xpose.msra.mxu0 %v670
    %732 = vmatpush.bf16.xpose.msra.mxu0 %v669
    %733 = vmatpush.bf16.xpose.msra.mxu0 %v668
    %734 = vmatpush.bf16.xpose.msra.mxu0 %v667
    %735 = vmatpush.bf16.xpose.msra.mxu0 %v666
    %736 = vmatpush.bf16.xpose.msra.mxu0 %v665
    %737 = vmatmul.bf16.gmra.mxu0 %v728
    %v738 = vpop.f32.mrf.mxu0
    %v739 = vadd.f32 0.0, %v738
    %v740 = vpop.f32.mrf.mxu0
    %741 = vdwg.mxu0
    %742 = vmatpush.bf16.xpose.msra.mxu0 %v680
    %743 = vmatpush.bf16.xpose.msra.mxu0 %v679
    %744 = vmatpush.bf16.xpose.msra.mxu0 %v678
    %745 = vmatpush.bf16.xpose.msra.mxu0 %v677
    %746 = vmatpush.bf16.xpose.msra.mxu0 %v676
    %747 = vmatpush.bf16.xpose.msra.mxu0 %v675
    %748 = vmatpush.bf16.xpose.msra.mxu0 %v674
    %749 = vmatpush.bf16.xpose.msra.mxu0 %v673
    %750 = vmatmul.bf16.gmra.mxu0 %v728
    %v751 = vpop.f32.mrf.mxu0
    %v752 = vadd.f32 0.0, %v751
    %v753 = vpop.f32.mrf.mxu0
    %754 = vdwg.mxu0
    %v755 = vmul.f32 %v739, %v700
    %v756 = vmul.f32 %v752, %v701
    %v757 = vadd.f32 %v755, %v756
    %758 = vadd.xlane.f32.xlu0 %v757
    %v759 = vpop.xlane.xlu0 %758
    %v760 = vlaneseq
    %v761 = vshrl.u32 %v760, 7
    %v762 = vadd.s32 %v761, 8
    %v763 = vadd.s32 %v761, 16
    %v764 = vadd.s32 %v761, 24
    %v765 = vadd.s32 %v761, 32
    %v766 = vadd.s32 %v761, 40
    %v767 = vadd.s32 %v761, 48
    %v768 = vadd.s32 %v761, 56
    %v769 = vadd.s32 %v761, 64
    %v770 = vadd.s32 %v761, 72
    %v771 = vadd.s32 %v761, 80
    %v772 = vadd.s32 %v761, 88
    %v773 = vadd.s32 %v761, 96
    %v774 = vadd.s32 %v761, 104
    %v775 = vadd.s32 %v761, 112
    %v776 = vadd.s32 %v761, 120
    %v777 = vadd.s32 %v761, 128
    %v778 = vadd.s32 %v761, 136
    %v779 = vadd.s32 %v761, 144
    %v780 = vadd.s32 %v761, 152
    %v781 = vadd.s32 %v761, 160
    %v782 = vadd.s32 %v761, 168
    %v783 = vadd.s32 %v761, 176
    %v784 = vadd.s32 %v761, 184
    %v785 = vadd.s32 %v761, 192
    %v786 = vadd.s32 %v761, 200
    %v787 = vadd.s32 %v761, 208
    %v788 = vadd.s32 %v761, 216
    %v789 = vadd.s32 %v761, 224
    %v790 = vadd.s32 %v761, 232
    %v791 = vadd.s32 %v761, 240
    %v792 = vadd.s32 %v761, 248
    %v793 = vld [vmem:[%s7] sm:$0x1]
    %v794 = vperm.slane %v793, 0
    %vm795 = vcmp.eq.s32.totalorder %v761, %v794
    %vm796 = vcmp.eq.s32.totalorder %v762, %v794
    %vm797 = vcmp.eq.s32.totalorder %v763, %v794
    %vm798 = vcmp.eq.s32.totalorder %v764, %v794
    %vm799 = vcmp.eq.s32.totalorder %v765, %v794
    %vm800 = vcmp.eq.s32.totalorder %v766, %v794
    %vm801 = vcmp.eq.s32.totalorder %v767, %v794
    %vm802 = vcmp.eq.s32.totalorder %v768, %v794
    %vm803 = vcmp.eq.s32.totalorder %v769, %v794
    %vm804 = vcmp.eq.s32.totalorder %v770, %v794
    %vm805 = vcmp.eq.s32.totalorder %v771, %v794
    %vm806 = vcmp.eq.s32.totalorder %v772, %v794
    %vm807 = vcmp.eq.s32.totalorder %v773, %v794
    %vm808 = vcmp.eq.s32.totalorder %v774, %v794
    %vm809 = vcmp.eq.s32.totalorder %v775, %v794
    %vm810 = vcmp.eq.s32.totalorder %v776, %v794
    %vm811 = vcmp.eq.s32.totalorder %v777, %v794
    %vm812 = vcmp.eq.s32.totalorder %v778, %v794
    %vm813 = vcmp.eq.s32.totalorder %v779, %v794
    %vm814 = vcmp.eq.s32.totalorder %v780, %v794
    %vm815 = vcmp.eq.s32.totalorder %v781, %v794
    %vm816 = vcmp.eq.s32.totalorder %v782, %v794
    %vm817 = vcmp.eq.s32.totalorder %v783, %v794
    %vm818 = vcmp.eq.s32.totalorder %v784, %v794
    %vm819 = vcmp.eq.s32.totalorder %v785, %v794
    %vm820 = vcmp.eq.s32.totalorder %v786, %v794
    %vm821 = vcmp.eq.s32.totalorder %v787, %v794
    %vm822 = vcmp.eq.s32.totalorder %v788, %v794
    %vm823 = vcmp.eq.s32.totalorder %v789, %v794
    %vm824 = vcmp.eq.s32.totalorder %v790, %v794
    %vm825 = vcmp.eq.s32.totalorder %v791, %v794
    %vm826 = vcmp.eq.s32.totalorder %v792, %v794
    %v827 = vsel %vm795, 1.0, 0.0
    %v828 = vsel %vm796, 1.0, 0.0
    %v829 = vsel %vm797, 1.0, 0.0
    %v830 = vsel %vm798, 1.0, 0.0
    %v831 = vsel %vm799, 1.0, 0.0
    %v832 = vsel %vm800, 1.0, 0.0
    %v833 = vsel %vm801, 1.0, 0.0
    %v834 = vsel %vm802, 1.0, 0.0
    %v835 = vsel %vm803, 1.0, 0.0
    %v836 = vsel %vm804, 1.0, 0.0
    %v837 = vsel %vm805, 1.0, 0.0
    %v838 = vsel %vm806, 1.0, 0.0
    %v839 = vsel %vm807, 1.0, 0.0
    %v840 = vsel %vm808, 1.0, 0.0
    %v841 = vsel %vm809, 1.0, 0.0
    %v842 = vsel %vm810, 1.0, 0.0
    %v843 = vsel %vm811, 1.0, 0.0
    %v844 = vsel %vm812, 1.0, 0.0
    %v845 = vsel %vm813, 1.0, 0.0
    %v846 = vsel %vm814, 1.0, 0.0
    %v847 = vsel %vm815, 1.0, 0.0
    %v848 = vsel %vm816, 1.0, 0.0
    %v849 = vsel %vm817, 1.0, 0.0
    %v850 = vsel %vm818, 1.0, 0.0
    %v851 = vsel %vm819, 1.0, 0.0
    %v852 = vsel %vm820, 1.0, 0.0
    %v853 = vsel %vm821, 1.0, 0.0
    %v854 = vsel %vm822, 1.0, 0.0
    %v855 = vsel %vm823, 1.0, 0.0
    %v856 = vsel %vm824, 1.0, 0.0
    %v857 = vsel %vm825, 1.0, 0.0
    %v858 = vsel %vm826, 1.0, 0.0
    %859 = vmatpush.msra.mxu0 %v842
    %860 = vmatpush.msra.mxu0 %v841
    %861 = vmatpush.msra.mxu0 %v840
    %862 = vmatpush.msra.mxu0 %v839
    %863 = vmatpush.msra.mxu0 %v838
    %864 = vmatpush.msra.mxu0 %v837
    %865 = vmatpush.msra.mxu0 %v836
    %866 = vmatpush.msra.mxu0 %v835
    %867 = vmatpush.msra.mxu0 %v834
    %868 = vmatpush.msra.mxu0 %v833
    %869 = vmatpush.msra.mxu0 %v832
    %870 = vmatpush.msra.mxu0 %v831
    %871 = vmatpush.msra.mxu0 %v830
    %872 = vmatpush.msra.mxu0 %v829
    %873 = vmatpush.msra.mxu0 %v828
    %874 = vmatpush.msra.mxu0 %v827
    %875 = vmatmul.f32.gmra.mxu0 %v739
    %v876 = vpop.f32.mrf.mxu0
    %v877 = vadd.f32 0.0, %v876
    %878 = vdwg.mxu0
    %879 = vmatpush.msra.mxu0 %v858
    %880 = vmatpush.msra.mxu0 %v857
    %881 = vmatpush.msra.mxu0 %v856
    %882 = vmatpush.msra.mxu0 %v855
    %883 = vmatpush.msra.mxu0 %v854
    %884 = vmatpush.msra.mxu0 %v853
    %885 = vmatpush.msra.mxu0 %v852
    %886 = vmatpush.msra.mxu0 %v851
    %887 = vmatpush.msra.mxu0 %v850
    %888 = vmatpush.msra.mxu0 %v849
    %889 = vmatpush.msra.mxu0 %v848
    %890 = vmatpush.msra.mxu0 %v847
    %891 = vmatpush.msra.mxu0 %v846
    %892 = vmatpush.msra.mxu0 %v845
    %893 = vmatpush.msra.mxu0 %v844
    %894 = vmatpush.msra.mxu0 %v843
    %895 = vmatmul.f32.gmra.mxu0 %v752
    %v896 = vpop.f32.mrf.mxu0
    %v897 = vadd.f32 %v877, %v896
    %898 = vdwg.mxu0
    %v899 = vsub.f32 %v897, %v759
    %v900 = vadd.f32 %v899, 0.1
    %v901 = vmax.f32 %v900, 0.0
    %902 = vadd.xlane.f32.xlu0 %v901
    %v903 = vpop.xlane.xlu0 %902
    %v904 = vmul.f32 %v903, 0.0078125
    %v905 = vrot.slane %v904, 4
    %v906 = vadd.f32 %v904, %v905
    %v907 = vrot.slane %v906, 2
    %v908 = vadd.f32 %v906, %v907
    %v909 = vrot.slane %v908, 1
    %v910 = vadd.f32 %v908, %v909
    %vm911 = vcmask 0
    %912 = vst.msk [vmem:[#allocation4] sm:$0x1] %vm911, %v910
    // Predicated region
    $region34: #{hetegraphrec_forward.1} parent=1 // pred_check
      _
    $region35: #{hetegraphrec_forward.1} parent=1 // pred_check_branch
      %914 = sbr.rel (0) target = $region37
    $region36: #{hetegraphrec_forward.1} parent=1 // pred_region
      %916 = vsyncadd [#allocation3], 0
      %s917 = sshll.u32 [#allocation2], 4
      %s918 = int_to_ptr.vmem [resolvable:$true] %s917
      %s919 = sshll.u32 %s8, 4
      %s920 = int_to_ptr.hbm [resolvable:$true] %s919
      %925 = dma.vmem_to_hbm [thread:$0]  %s918, 4096, %s920, [#allocation3], 128, 128, 8
    $region37: #{hetegraphrec_forward.1} parent=1 // pred_fallthru
      _
    // Predicated region
    $region38: #{hetegraphrec_forward.1} parent=1 // pred_check
      _
    $region39: #{hetegraphrec_forward.1} parent=1 // pred_check_branch
      %927 = sbr.rel (0) target = $region41
    $region40: #{hetegraphrec_forward.1} parent=1 // pred_region
      %929 = vsyncadd [#allocation5], 0
      %s931 = sshll.u32 [#allocation4], 4
      %s932 = int_to_ptr.vmem [resolvable:$true] %s931
      %s933 = sshll.u32 %s9, 4
      %s934 = int_to_ptr.hbm [resolvable:$true] %s933
      %936 = dma.vmem_to_hbm [thread:$0]  %s932, 16, %s934, [#allocation5]
    $region41: #{hetegraphrec_forward.1} parent=1 // pred_fallthru
      _
    // Predicated region
    $region42: #{hetegraphrec_forward.1} parent=1 // pred_check
      _
    $region43: #{hetegraphrec_forward.1} parent=1 // pred_check_branch
      %938 = sbr.rel (0) target = $region45
    $region44: #{hetegraphrec_forward.1} parent=1 // pred_region
      %940 = dma.done [#allocation3], 4096
    $region45: #{hetegraphrec_forward.1} parent=1 // pred_fallthru
      _
    // Predicated region
    $region46: #{hetegraphrec_forward.1} parent=1 // pred_check
      _
    $region47: #{hetegraphrec_forward.1} parent=1 // pred_check_branch
      %942 = sbr.rel (0) target = $region49
    $region48: #{hetegraphrec_forward.1} parent=1 // pred_region
      %944 = dma.done [#allocation5], 16
    $region49: #{hetegraphrec_forward.1} parent=1 // pred_fallthru
      _
    %945 = vsyncpa [#allocation3], 1
    %946 = vsyncpa [#allocation5], 1

</llo_original>
